<compile_context>
chip_gen: v7x
topology: tpu7x:2x2x1
jax: 0.10.0
libtpu: 0.0.40
codegen_flags: <defaults>
</compile_context>

<pallas_src>
import functools
import numpy as np
import jax
import jax.numpy as jnp
from jax.experimental import pallas as pl
from jax.experimental.pallas import tpu as pltpu

_LANES = 128
_BLOCK_BYTE_BUDGET = 4 << 20   # per buffer set; double-buffered stays well
                               # under v5e's 16 MiB / v7x's 32 MiB scoped VMEM.


# ----------------------------- Pallas kernel --------------------------------
def _postprocess_kernel(K, corners_ref, scale_ref, out_ref):
    """One grid step = a wide lane-dense block covering many images.

    corners_ref : VMEM [rows_in, W]  f32 -- rows 0..K-1 = x, rows K..2K-1 = y,
                                            markers on the lane axis (128/img).
    scale_ref   : VMEM [rows_in, W]  f32 -- rows 0..K-1 = sx, rows K..2K-1 = sy,
                                            broadcast over each image's lanes.
    out_ref     : VMEM [8, W]        f32 -- rows 0..3 = min_x,min_y,max_x,max_y,
                                            rows 4..7 = validity (broadcast).
    """
    # corners * scale_tensor: one full-vreg elementwise multiply, no scalar loads.
    scaled = corners_ref[...] * scale_ref[...]              # [rows_in, W]
    xs = scaled[0:K, :]
    ys = scaled[K:2 * K, :]

    # torch.min/max over the corner dim: markers stay lane-resident, so this is
    # a cheap K-sublane reduction (no cross-lane XLU shuffles).
    min_x = jnp.min(xs, axis=0, keepdims=True)              # [1, W]
    min_y = jnp.min(ys, axis=0, keepdims=True)
    max_x = jnp.max(xs, axis=0, keepdims=True)
    max_y = jnp.max(ys, axis=0, keepdims=True)

    # torch.isfinite(boxes).all(dim=1): |v| < inf is False for +-inf and NaN
    # (NaN propagates through min/max above, matching torch).
    inf = jnp.float32(jnp.inf)
    finite = ((jnp.abs(min_x) < inf) & (jnp.abs(min_y) < inf)
              & (jnp.abs(max_x) < inf) & (jnp.abs(max_y) < inf))
    valid = finite.astype(jnp.float32)                      # [1, W]

    # Assemble the whole output tile and write it with ONE unmasked full-tile
    # store (8 sublanes x full lane width).
    rows_out, width = out_ref.shape
    slab = jnp.concatenate(
        [min_x, min_y, max_x, max_y,
         jnp.broadcast_to(valid, (rows_out - 4, width))], axis=0)
    out_ref[...] = slab


@jax.jit
def postprocess_corners_batched(corners, scales):
    """corners: [B, N, K, 2] f32 (K corners per marker, last dim = (x, y)).
       scales:  [B, 2] f32 = per-image (scale_x, scale_y).
       Returns (scaled [B,N,K,2], boxes [B,N,4] = x1,y1,x2,y2, valid [B,N] bool)."""
    B, N, K, _ = corners.shape
    corners = corners.astype(jnp.float32)
    scales = scales.astype(jnp.float32)

    n_pad = max(_LANES, -(-N // _LANES) * _LANES)   # markers -> lanes, pad to 128
    rows_in = -(-(2 * K) // 8) * 8                  # packed corner rows (x | y)
    rows_out = 8                                    # 4 box rows + 4 validity rows

    # Images-per-block from a VMEM byte budget (corners + scale in, box/valid out).
    bytes_per_img = n_pad * 4 * (2 * rows_in + rows_out)
    imgs_per_block = max(1, min(B, _BLOCK_BYTE_BUDGET // bytes_per_img))
    n_blocks = pl.cdiv(B, imgs_per_block)
    B_pad = n_blocks * imgs_per_block
    w_block = imgs_per_block * n_pad

    # Pack corners to [rows_in, B_pad*n_pad]: marker -> lanes, (coord,corner) ->
    # sublanes.  Padded lanes / padded images stay zero; they would come out
    # "valid" but are sliced off with [:B, :N] below, so they never leak.
    xy = jnp.transpose(corners, (3, 2, 0, 1)).reshape(2 * K, B, N)
    packed = jnp.zeros((rows_in, B_pad, n_pad), jnp.float32).at[:2 * K, :B, :N].set(xy)
    packed = packed.reshape(rows_in, B_pad * n_pad)

    # Lane-dense scale slab with the same layout: rows 0..K-1 = sx, K..2K-1 = sy,
    # broadcast across each image's 128-lane column (built in XLA, fused under jit).
    sxy = jnp.repeat(scales.T, K, axis=0)                    # [2K, B]
    scale_slab = jnp.zeros((rows_in, B_pad, n_pad), jnp.float32).at[:2 * K, :B, :].set(
        jnp.broadcast_to(sxy[:, :, None], (2 * K, B, n_pad)))
    scale_slab = scale_slab.reshape(rows_in, B_pad * n_pad)

    out = pl.pallas_call(
        functools.partial(_postprocess_kernel, K),
        out_shape=jax.ShapeDtypeStruct((rows_out, B_pad * n_pad), jnp.float32),
        grid=(n_blocks,),
        in_specs=[
            pl.BlockSpec((rows_in, w_block), lambda i: (0, i)),   # corners
            pl.BlockSpec((rows_in, w_block), lambda i: (0, i)),   # scales
        ],
        out_specs=pl.BlockSpec((rows_out, w_block), lambda i: (0, i)),
        compiler_params=pltpu.CompilerParams(
            dimension_semantics=("parallel",)),                   # megacore on v7x
    )(packed, scale_slab)

    # Unpack (plain XLA glue, fused under jit).
    out = out.reshape(rows_out, B_pad, n_pad)
    boxes = jnp.transpose(out[0:4, :B, :N], (1, 2, 0))            # [B, N, 4]
    valid = out[4, :B, :N] > jnp.float32(0.5)                     # [B, N]
    # Scaled corners in their natural layout (no kernel round-trip / relayout).
    scaled = corners * scales[:, None, None, :]                   # [B, N, K, 2]
    return scaled, boxes, valid


# ------------------------- ClassicalDetector (JAX) ---------------------------
class ClassicalDetectorJax:
    def __init__(self, num_markers=5, num_corner_pts=4, num_classes=36, seed=0):
        self.num_markers = num_markers
        self.num_corner_pts = num_corner_pts
        self.num_classes = num_classes
        self.key = jax.random.PRNGKey(seed)
        # Matching the PyTorch module's flags.
        self.test_topk_per_image = 0
        self.test_sort_instances = False
        self.test_apply_nms = False
        self.nms_score_criteria = "none"
        self.marker_postprocessing = False

    # ---- marker_generator.recognize stand-in ----
    def _recognize(self, img_hwc_uint8, key):
        # TODO(synk): classical fiducial-marker detection/decoding (OpenCV contour
        # tracing + bit reading) has no Pallas equivalent; synthesize deterministic
        # detections using the image's true H/W so the scaling path is exercised.
        h, w, _ = img_hwc_uint8.shape
        kx, ky, kid = jax.random.split(key, 3)
        xs = jax.random.uniform(kx, (self.num_markers, self.num_corner_pts),
                                minval=0.0, maxval=float(w - 1))
        ys = jax.random.uniform(ky, (self.num_markers, self.num_corner_pts),
                                minval=0.0, maxval=float(h - 1))
        corners = jnp.stack([xs, ys], axis=-1).astype(jnp.float32)   # [N, K, 2]
        ids = jax.random.randint(kid, (self.num_markers,), 0, self.num_classes,
                                 dtype=jnp.int32)
        return corners, ids

    def inference(self, images):
        results = []
        for i, img in enumerate(images):                             # img: [C, H, W]
            img_hwc = jnp.transpose(img, (1, 2, 0)).astype(jnp.uint8)  # CHW -> HWC
            corners, ids = self._recognize(img_hwc, jax.random.fold_in(self.key, i))
            result = {
                "corners": corners,
                "image_shape": (int(img_hwc.shape[0]), int(img_hwc.shape[1])),
                "obj_scores": jnp.ones((corners.shape[0],), jnp.float32),
            }
            if corners.shape[0] != 0:
                result["pred_classes"] = ids
            results.append(result)
        return results

    def postprocess(self, instances, batched_inputs, image_sizes):
        # Per-image output sizes and scale factors (host scalars only).
        out_sizes, scale_list = [], []
        for res, inp, im_size in zip(instances, batched_inputs, image_sizes):
            h = inp.get("height", im_size[0])
            w = inp.get("width", im_size[1])
            out_sizes.append((h, w))
            scale_list.append((float(w) / float(res["image_shape"][1]),
                               float(h) / float(res["image_shape"][0])))

        # Empty-detection branch (matches the PyTorch early return).
        if instances[0]["corners"].shape[0] == 0:
            return [{"instances": {"image_size": sz, "pred_corners": res["corners"]}}
                    for res, sz in zip(instances, out_sizes)]

        # TODO(synk): a real recognize() yields a ragged per-image marker count;
        # pad/mask per image before batching.  The synthetic detector is uniform.
        corners_all = jnp.stack([r["corners"] for r in instances], axis=0)  # [B,N,K,2]
        scales = jnp.asarray(scale_list, jnp.float32)                       # [B,2]

        # ONE Pallas call for the whole batch (grid of 1 step for typical B).
        scaled, boxes, valid = postprocess_corners_batched(corners_all, scales)

        # Single device->host transfer of the batch's validity masks, outside the
        # per-image loop (boolean filtering has data-dependent shape -> host glue).
        valid_np = np.asarray(valid)                                        # [B,N]

        processed = []
        for b, (res, sz) in enumerate(zip(instances, out_sizes)):
            keep = np.nonzero(valid_np[b])[0]
            inst = {
                "image_size": sz,
                "scores": res["obj_scores"][keep],
                "pred_classes": res["pred_classes"][keep],
                "pred_boxes": boxes[b][keep],       # [n_valid, 4] = x1,y1,x2,y2
                "pred_corners": scaled[b][keep],    # [n_valid, K, 2]
            }
            processed.append({"instances": inst})
        return processed

    def forward(self, batched_inputs, do_postprocess=True):
        # ImageList.from_tensors(..., 1): stack (same-size inputs -> no padding).
        images = jnp.stack([x["image"] for x in batched_inputs], axis=0)    # [B,C,H,W]
        image_sizes = [(int(x["image"].shape[1]), int(x["image"].shape[2]))
                       for x in batched_inputs]
        results = self.inference(images)
        if do_postprocess:
            return self.postprocess(results, batched_inputs, image_sizes)
        return results


# ----------------------------------- main ------------------------------------
if __name__ == "__main__":
    key = jax.random.PRNGKey(0)
    k_img, k_test = jax.random.split(key)

    # ---- direct kernel check against a pure-JAX reference ----
    tc = jax.random.uniform(k_test, (2, 5, 4, 2), jnp.float32, 0.0, 15.0)
    ts = jnp.array([[2.0, 0.5], [1.0, 3.0]], jnp.float32)
    s, bxs, vld = postprocess_corners_batched(tc, ts)
    jax.block_until_ready(bxs)
    ref_s = tc * ts[:, None, None, :]
    ref_b = jnp.concatenate([ref_s.min(axis=2), ref_s.max(axis=2)], axis=-1)
    assert jnp.allclose(s, ref_s, atol=1e-5), "scaled-corner mismatch"
    assert jnp.allclose(bxs, ref_b, atol=1e-5), "box mismatch (direct)"
    assert bool(jnp.all(vld)), "validity mismatch (direct)"

    # ---- non-finite handling check (NaN / inf corners must be dropped) ----
    tc_bad = tc.at[0, 1, 2, 0].set(jnp.nan).at[1, 3, 0, 1].set(jnp.inf)
    _, _, vbad = postprocess_corners_batched(tc_bad, ts)
    jax.block_until_ready(vbad)
    assert not bool(vbad[0, 1]) and not bool(vbad[1, 3]), "non-finite not masked"
    assert bool(vbad[0, 0]) and bool(vbad[1, 0]), "finite markers wrongly masked"

    # ---- end-to-end forward ----
    B, C, H, W = 2, 3, 16, 16
    imgs = jax.random.randint(k_img, (B, C, H, W), 0, 256,
                              dtype=jnp.int32).astype(jnp.uint8)
    batched_inputs = [
        {"image": imgs[0], "height": 32, "width": 32},   # upscale output 2x
        {"image": imgs[1], "height": 16, "width": 16},   # identity scale
    ]

    detector = ClassicalDetectorJax(num_markers=5, num_corner_pts=4, seed=0)
    outputs = detector.forward(batched_inputs, do_postprocess=True)

    for out in outputs:
        inst = out["instances"]
        jax.block_until_ready(inst["pred_boxes"])
        jax.block_until_ready(inst["pred_corners"])

    # Sanity: boxes really are (min, max) of the scaled corners; all markers kept.
    inst0 = outputs[0]["instances"]
    assert inst0["pred_boxes"].shape[0] == 5, "unexpected detection count"
    ref_min = jnp.min(inst0["pred_corners"], axis=1)
    ref_max = jnp.max(inst0["pred_corners"], axis=1)
    ref_boxes = jnp.concatenate([ref_min, ref_max], axis=1)
    assert jnp.allclose(inst0["pred_boxes"], ref_boxes, atol=1e-4), "box mismatch"

    print("KERNEL_OK")
</pallas_src>

<mosaic_0001>
module attributes {stable_mosaic.version = 11 : i64} {
  func.func @_postprocess_kernel(%arg0: i32, %arg1: memref<8x256xf32, #tpu.memory_space<vmem>>, %arg2: memref<8x256xf32, #tpu.memory_space<vmem>>, %arg3: memref<8x256xf32, #tpu.memory_space<vmem>>) attributes {dimension_semantics = [#tpu.dimension_semantics<parallel>], iteration_bounds = array<i64: 1>, scalar_prefetch = 0 : i64, scratch_operands = 0 : i64, tpu.core_type = #tpu.core_type<tc>, window_params = [{transform_indices = @transform_0, window_bounds = array<i64: 8, 256>}, {transform_indices = @transform_1, window_bounds = array<i64: 8, 256>}, {transform_indices = @transform_2, window_bounds = array<i64: 8, 256>}]} {
    %c0 = arith.constant 0 : index
    %c0_0 = arith.constant 0 : index
    %0 = vector.load %arg1[%c0, %c0_0] : memref<8x256xf32, #tpu.memory_space<vmem>>, vector<8x256xf32>
    %c0_1 = arith.constant 0 : index
    %c0_2 = arith.constant 0 : index
    %1 = vector.load %arg2[%c0_1, %c0_2] : memref<8x256xf32, #tpu.memory_space<vmem>>, vector<8x256xf32>
    %2 = arith.mulf %0, %1 : vector<8x256xf32>
    %3 = vector.extract_strided_slice %2 {offsets = [0, 0], sizes = [4, 256], strides = [1, 1]} : vector<8x256xf32> to vector<4x256xf32>
    %4 = vector.extract_strided_slice %2 {offsets = [4, 0], sizes = [4, 256], strides = [1, 1]} : vector<8x256xf32> to vector<4x256xf32>
    %cst = arith.constant dense<0x7F800000> : vector<256xf32>
    %5 = vector.multi_reduction <minimumf>, %3, %cst [0] : vector<4x256xf32> to vector<256xf32>
    %6 = vector.shape_cast %5 : vector<256xf32> to vector<1x256xf32>
    %cst_3 = arith.constant dense<0x7F800000> : vector<256xf32>
    %7 = vector.multi_reduction <minimumf>, %4, %cst_3 [0] : vector<4x256xf32> to vector<256xf32>
    %8 = vector.shape_cast %7 : vector<256xf32> to vector<1x256xf32>
    %cst_4 = arith.constant dense<0xFF800000> : vector<256xf32>
    %9 = vector.multi_reduction <maximumf>, %3, %cst_4 [0] : vector<4x256xf32> to vector<256xf32>
    %10 = vector.shape_cast %9 : vector<256xf32> to vector<1x256xf32>
    %cst_5 = arith.constant dense<0xFF800000> : vector<256xf32>
    %11 = vector.multi_reduction <maximumf>, %4, %cst_5 [0] : vector<4x256xf32> to vector<256xf32>
    %12 = vector.shape_cast %11 : vector<256xf32> to vector<1x256xf32>
    %13 = math.absf %6 : vector<1x256xf32>
    %cst_6 = arith.constant 0x7F800000 : f32
    %14 = vector.broadcast %cst_6 : f32 to vector<1x256xf32>
    %15 = arith.cmpf olt, %13, %14 : vector<1x256xf32>
    %16 = math.absf %8 : vector<1x256xf32>
    %cst_7 = arith.constant 0x7F800000 : f32
    %17 = vector.broadcast %cst_7 : f32 to vector<1x256xf32>
    %18 = arith.cmpf olt, %16, %17 : vector<1x256xf32>
    %19 = arith.andi %15, %18 : vector<1x256xi1>
    %20 = math.absf %10 : vector<1x256xf32>
    %cst_8 = arith.constant 0x7F800000 : f32
    %21 = vector.broadcast %cst_8 : f32 to vector<1x256xf32>
    %22 = arith.cmpf olt, %20, %21 : vector<1x256xf32>
    %23 = arith.andi %19, %22 : vector<1x256xi1>
    %24 = math.absf %12 : vector<1x256xf32>
    %cst_9 = arith.constant 0x7F800000 : f32
    %25 = vector.broadcast %cst_9 : f32 to vector<1x256xf32>
    %26 = arith.cmpf olt, %24, %25 : vector<1x256xf32>
    %27 = arith.andi %23, %26 : vector<1x256xi1>
    %28 = arith.extui %27 : vector<1x256xi1> to vector<1x256xi32>
    %29 = arith.sitofp %28 : vector<1x256xi32> to vector<1x256xf32>
    %30 = vector.shape_cast %29 : vector<1x256xf32> to vector<1x256xf32>
    %31 = vector.broadcast %30 : vector<1x256xf32> to vector<4x256xf32>
    %32 = tpu.concatenate %6, %8, %10, %12, %31 in 0 : vector<1x256xf32>, vector<1x256xf32>, vector<1x256xf32>, vector<1x256xf32>, vector<4x256xf32> -> vector<8x256xf32>
    %c0_10 = arith.constant 0 : index
    %c0_11 = arith.constant 0 : index
    %33 = vector.load %arg3[%c0_10, %c0_11] : memref<8x256xf32, #tpu.memory_space<vmem>>, vector<8x256xf32>
    tpu.vector_store %arg3[%c0_10, %c0_11], %32 {strides = array<i32>} : memref<8x256xf32, #tpu.memory_space<vmem>>, vector<8x256xf32>,
    return
  }
  func.func @transform_0(%arg0: i32) -> (i32, i32) {
    %c0_i32 = arith.constant 0 : i32
    %c0_i32_0 = arith.constant 0 : i32
    return %c0_i32, %arg0 : i32, i32
  }
  func.func @transform_1(%arg0: i32) -> (i32, i32) {
    %c0_i32 = arith.constant 0 : i32
    %c0_i32_0 = arith.constant 0 : i32
    return %c0_i32, %arg0 : i32, i32
  }
  func.func @transform_2(%arg0: i32) -> (i32, i32) {
    %c0_i32 = arith.constant 0 : i32
    %c0_i32_0 = arith.constant 0 : i32
    return %c0_i32, %arg0 : i32, i32
  }
}

</mosaic_0001>

<llo_original>
// kernel: postprocess_corners_batched.1
$region0: #{postprocess_corners_batched.1}
  #allocation0 [shape = 'u32[]', space=smem, size = 0x4, offset = 0x4, fixed_abs, tag = 'smem constant byte address 0x4 - core index']
  #allocation1 [shape = 'u32[144,128]{1,0:T(1,128)}', space=vmem, size = 0x12000, scoped, tag = 'internal scratch']
  %s0 = inlined_call_operand.vmem [shape: f32[8,256], index: 0, kind: input, shape index: {}]
  %s1 = inlined_call_operand.vmem [shape: f32[8,256], index: 1, kind: input, shape index: {}]
  %s2 = inlined_call_operand.vmem [shape: f32[8,256], index: 2, kind: output, shape index: {}]
  %s3 = sld [smem:[#allocation0]]
  $region18: #{postprocess_corners_batched.1} parent=0
    _
  %s5 = ssub.s32 1, %s3
  %s6 = scalar_select 0, %s5, %s3
  // Predicated region
  $region2: #{postprocess_corners_batched.1} parent=0 // pred_check
    _
  $region3: #{postprocess_corners_batched.1} parent=0 // pred_check_branch
    %8 = sbr.rel (0) target = $region5
  $region4: #{postprocess_corners_batched.1} parent=0 // pred_region
    _
  $region5: #{postprocess_corners_batched.1} parent=0 // pred_fallthru
    _
  // Predicated region
  $region6: #{postprocess_corners_batched.1} parent=0 // pred_check
    _
  $region7: #{postprocess_corners_batched.1} parent=0 // pred_check_branch
    %10 = sbr.rel (0) target = $region9
  $region8: #{postprocess_corners_batched.1} parent=0 // pred_region
    _
  $region9: #{postprocess_corners_batched.1} parent=0 // pred_fallthru
    _
  %v11 = vld [vmem:[%s0] sm:$0xff]
  %v12 = vld [vmem:[%s0 + $0x8] sm:$0xff]
  %v13 = vld [vmem:[%s1] sm:$0xff]
  %v14 = vld [vmem:[%s1 + $0x8] sm:$0xff]
  %v15 = vmul.f32 %v11, %v13
  %v16 = vmul.f32 %v12, %v14
  %vm17 = vcmask 1043456
  %v18 = vsel %vm17, %v15, inf
  %v19 = vrot.slane %v18, 4
  %v20 = vmin.f32 %v18, %v19
  %v21 = vrot.slane %v20, 2
  %v22 = vmin.f32 %v20, %v21
  %v23 = vrot.slane %v22, 1
  %v24 = vmin.f32 %v22, %v23
  %v25 = vsel %vm17, %v16, inf
  %v26 = vrot.slane %v25, 4
  %v27 = vmin.f32 %v25, %v26
  %v28 = vrot.slane %v27, 2
  %v29 = vmin.f32 %v27, %v28
  %v30 = vrot.slane %v29, 1
  %v31 = vmin.f32 %v29, %v30
  %vm32 = vcmask 1047556
  %v33 = vsel %vm32, %v15, inf
  %v34 = vrot.slane %v33, 4
  %v35 = vmin.f32 %v33, %v34
  %v36 = vrot.slane %v35, 2
  %v37 = vmin.f32 %v35, %v36
  %v38 = vrot.slane %v37, 1
  %v39 = vmin.f32 %v37, %v38
  %v40 = vsel %vm32, %v16, inf
  %v41 = vrot.slane %v40, 4
  %v42 = vmin.f32 %v40, %v41
  %v43 = vrot.slane %v42, 2
  %v44 = vmin.f32 %v42, %v43
  %v45 = vrot.slane %v44, 1
  %v46 = vmin.f32 %v44, %v45
  %v47 = vsel %vm17, %v15, -inf
  %v48 = vrot.slane %v47, 4
  %v49 = vmax.f32 %v47, %v48
  %v50 = vrot.slane %v49, 2
  %v51 = vmax.f32 %v49, %v50
  %v52 = vrot.slane %v51, 1
  %v53 = vmax.f32 %v51, %v52
  %v54 = vsel %vm17, %v16, -inf
  %v55 = vrot.slane %v54, 4
  %v56 = vmax.f32 %v54, %v55
  %v57 = vrot.slane %v56, 2
  %v58 = vmax.f32 %v56, %v57
  %v59 = vrot.slane %v58, 1
  %v60 = vmax.f32 %v58, %v59
  %v61 = vsel %vm32, %v15, -inf
  %v62 = vrot.slane %v61, 4
  %v63 = vmax.f32 %v61, %v62
  %v64 = vrot.slane %v63, 2
  %v65 = vmax.f32 %v63, %v64
  %v66 = vrot.slane %v65, 1
  %v67 = vmax.f32 %v65, %v66
  %v68 = vsel %vm32, %v16, -inf
  %v69 = vrot.slane %v68, 4
  %v70 = vmax.f32 %v68, %v69
  %v71 = vrot.slane %v70, 2
  %v72 = vmax.f32 %v70, %v71
  %v73 = vrot.slane %v72, 1
  %v74 = vmax.f32 %v72, %v73
  %v75 = vand.u32 2147483647, %v24
  %v76 = vand.u32 2147483647, %v31
  %vm77 = vcmp.lt.f32.partialorder %v75, inf
  %vm78 = vcmp.lt.f32.partialorder %v76, inf
  %v79 = vand.u32 2147483647, %v39
  %v80 = vand.u32 2147483647, %v46
  %vm81 = vcmp.lt.f32.partialorder %v79, inf
  %vm82 = vcmp.lt.f32.partialorder %v80, inf
  %vm83 = vmand %vm77, %vm81
  %vm84 = vmand %vm78, %vm82
  %v85 = vand.u32 2147483647, %v53
  %v86 = vand.u32 2147483647, %v60
  %vm87 = vcmp.lt.f32.partialorder %v85, inf
  %vm88 = vcmp.lt.f32.partialorder %v86, inf
  %vm89 = vmand %vm83, %vm87
  %vm90 = vmand %vm84, %vm88
  %v91 = vand.u32 2147483647, %v67
  %v92 = vand.u32 2147483647, %v74
  %vm93 = vcmp.lt.f32.partialorder %v91, inf
  %vm94 = vcmp.lt.f32.partialorder %v92, inf
  %vm95 = vmand %vm89, %vm93
  %vm96 = vmand %vm90, %vm94
  %v97 = vsel %vm95, 1, 0
  %v98 = vsel %vm96, 1, 0
  %v99 = vcvt.s32.f32 %v97
  %v100 = vcvt.s32.f32 %v98
  %vm101 = vcmask 1040384
  %v102 = vsel %vm101, %v24, %v39
  %v103 = vsel %vm101, %v31, %v46
  %vm104 = vcmask 1041408
  %v105 = vsel %vm104, %v102, %v53
  %v106 = vsel %vm104, %v103, %v60
  %vm107 = vcmask 1042432
  %v108 = vsel %vm107, %v105, %v67
  %v109 = vsel %vm107, %v106, %v74
  %v110 = vsel %vm17, %v108, %v99
  %v111 = vsel %vm17, %v109, %v100
  %112 = vst [vmem:[%s2] sm:$0xff] %v110
  %113 = vst [vmem:[%s2 + $0x8] sm:$0xff] %v111
  // Predicated region
  $region10: #{postprocess_corners_batched.1} parent=0 // pred_check
    _
  $region11: #{postprocess_corners_batched.1} parent=0 // pred_check_branch
    %115 = sbr.rel (0) target = $region13
  $region12: #{postprocess_corners_batched.1} parent=0 // pred_region
    _
  $region13: #{postprocess_corners_batched.1} parent=0 // pred_fallthru
    _
  // Predicated region
  $region14: #{postprocess_corners_batched.1} parent=0 // pred_check
    _
  $region15: #{postprocess_corners_batched.1} parent=0 // pred_check_branch
    %117 = sbr.rel (0) target = $region17
  $region16: #{postprocess_corners_batched.1} parent=0 // pred_region
    _
  $region17: #{postprocess_corners_batched.1} parent=0 // pred_fallthru
    _

</llo_original>
